<compile_context>
chip_gen: v7x
topology: tpu7x:2x2x1
jax: 0.10.0
libtpu: 0.0.40
codegen_flags: <defaults>
</compile_context>

<pallas_src>
import jax
import jax.numpy as jnp
from jax.experimental import pallas as pl
from jax.experimental.pallas import tpu as pltpu


_TARGET_TILE_BYTES = 8 << 20   # ~8 MiB x-tiles: <7% per-step overhead, and
                               # 2x(in+out) = 32 MiB fits v7x's 64 MiB VMEM.
_MIN_SPLIT_BYTES = 4 << 20     # force >= 2 grid steps above this total size.
_VMEM_CAP_BYTES = 48 << 20     # hard cap on the scoped-VMEM request (v7x-safe).
_MAX_TB = 2048                 # bounds the lane-padded (TB,3) param buffers.
_DTYPE_BYTES = 4


def _round_up(x, m):
    return ((x + m - 1) // m) * m


def _choose_tiling(n, chw):
    """Pick (tb, tc, n_pad, chw_pad).

    tc: multiple of 128 (lane axis).  tb: multiple of 8, or == N when N < 8.
    tb*tc*4B <= ~_TARGET_TILE_BYTES.  If the whole (padded) array would fit in
    a single tile but is larger than a few MiB, split one axis so the grid has
    >= 2 parallel steps (v7x dual TensorCore + pipelining).
    """
    target_elems = _TARGET_TILE_BYTES // _DTYPE_BYTES
    tb_unit = n if n < 8 else 8

    chw128 = _round_up(chw, 128)
    max_tc = max(512, (target_elems // max(tb_unit, 1)) // 128 * 128)
    tc = max(128, min(chw128, max_tc))

    if n < 8:
        tb = tb_unit
    else:
        rows_fit = max(tb_unit, target_elems // tc)
        tb = max(tb_unit, (rows_fit // tb_unit) * tb_unit)
        tb = min(tb, _round_up(n, tb_unit), _MAX_TB)

    n_pad = _round_up(n, tb)
    chw_pad = _round_up(chw, tc)

    total_bytes = n * chw * _DTYPE_BYTES
    if (n_pad // tb) * (chw_pad // tc) == 1 and total_bytes > _MIN_SPLIT_BYTES:
        if chw_pad // 128 >= 2:
            tc = _round_up((chw_pad + 1) // 2, 128)
            chw_pad = _round_up(chw, tc)
        elif tb >= 2 * tb_unit:
            tb = max(tb_unit, ((tb // 2) // tb_unit) * tb_unit)
            n_pad = _round_up(n, tb)

    return tb, tc, n_pad, chw_pad


def _posterize_kernel(x_ref, p_ref, o_ref):
    """x_ref/o_ref: (TB, TC) f32 tiles; p_ref: (TB, 3) per-batch factors.

    p[:, 0] = 1 - b_hard            (keep-original coefficient)
    p[:, 1] = 2**(bits - 8)         (= 1/q, exact power of two)
    p[:, 2] = b_hard * 2**(8-bits)/255

    posterize(x, bits) for float images in [0, 1]:
        u8   = uint8(x * 255)            (truncation == floor here)
        mask = ~(2**(8 - bits) - 1)      (keep the top `bits` bits)
        out  = (u8 & mask) / 255
    implemented as floor(floor(x*255) * inv_q) * (q/255), then gated/blended.
    """
    x = x_ref[...]                       # (TB, TC)
    p = p_ref[...]                       # (TB, 3)
    coeff_x = p[:, 0:1]                  # (TB, 1) lane-broadcast below
    inv_q = p[:, 1:2]
    scale_eff = p[:, 2:3]

    posterized = jnp.floor(jnp.floor(x * 255.0) * inv_q) * scale_eff
    o_ref[...] = coeff_x * x + posterized


@jax.jit
def dposterize_forward(x_nchw, bits, b_hard):
    """x_nchw: (N, C, H, W) float32 in [0,1]; bits, b_hard: (N,) float32."""
    N, C, H, W = x_nchw.shape
    CHW = C * H * W
    x = x_nchw.reshape(N, CHW).astype(jnp.float32)

    # Per-batch posterize factors (powers of two, exact in f32), gate folded in.
    bits_f = bits.astype(jnp.float32)
    b = b_hard.astype(jnp.float32)
    q = jnp.exp2(8.0 - bits_f)
    inv_q = jnp.exp2(bits_f - 8.0)
    params = jnp.stack([1.0 - b, inv_q, b * (q / 255.0)], axis=1)  # (N, 3)

    tb, tc, n_pad, chw_pad = _choose_tiling(N, CHW)
    if n_pad != N or chw_pad != CHW:
        x = jnp.pad(x, ((0, n_pad - N), (0, chw_pad - CHW)))
    if n_pad != N:
        params = jnp.pad(params, ((0, n_pad - N), (0, 0)))

    grid = (n_pad // tb, chw_pad // tc)
    x_spec = pl.BlockSpec((tb, tc), lambda i, j: (i, j))
    p_spec = pl.BlockSpec((tb, 3), lambda i, j: (i, 0))   # resident across CHW axis

    # Scoped-VMEM budget: double-buffered in + out tiles, lane-padded param
    # buffers, plus headroom.  Capped at 48 MiB (inside v7x's 64 MiB VMEM).
    tile_bytes = tb * tc * _DTYPE_BYTES
    param_bytes = tb * 128 * _DTYPE_BYTES          # (tb, 3) lane-pads to 128
    vmem_limit = min(_VMEM_CAP_BYTES,
                     max(8 << 20, 4 * tile_bytes + 2 * param_bytes + (2 << 20)))

    cost = pl.CostEstimate(
        flops=7 * N * CHW,
        transcendentals=0,
        bytes_accessed=2 * N * CHW * _DTYPE_BYTES + N * 3 * _DTYPE_BYTES,
    )

    out = pl.pallas_call(
        _posterize_kernel,
        out_shape=jax.ShapeDtypeStruct((n_pad, chw_pad), jnp.float32),
        grid_spec=pl.GridSpec(
            grid=grid,
            in_specs=[x_spec, p_spec],
            out_specs=x_spec,
        ),
        compiler_params=pltpu.CompilerParams(
            dimension_semantics=("parallel", "parallel"),
            vmem_limit_bytes=vmem_limit,
        ),
        cost_estimate=cost,
    )(x, params)

    # `out + st_m.view(-1,1,1,1) - st_m.view(-1,1,1,1).detach()` is a no-op in
    # the forward value: just strip the padding and reshape back to NCHW.
    return out[:N, :CHW].reshape(N, C, H, W)


if __name__ == "__main__":
    # Deterministic "module parameters" (daug_param_init equivalents).
    low_m, high_m = 4.0, 8.0          # posterize bit range
    apply_prob = 0.7                  # learnable application probability

    key = jax.random.PRNGKey(0)
    k_x, k_m, k_b = jax.random.split(key, 3)

    N, C, H, W = 2, 4, 16, 16
    x = jax.random.uniform(k_x, (N, C, H, W), dtype=jnp.float32)  # image in [0,1]

    # rsample_m((N,)) then straight-through rounding -> integer-valued bits.
    m = jax.random.uniform(k_m, (N,), dtype=jnp.float32,
                           minval=low_m, maxval=high_m)
    bits = jnp.round(m)

    # rsample_b((N,)) -> hard Bernoulli gate (straight-through in the original).
    b_hard = (jax.random.uniform(k_b, (N,), dtype=jnp.float32)
              < apply_prob).astype(jnp.float32)

    out = dposterize_forward(x, bits, b_hard)
    jax.block_until_ready(out)

    # Lightweight sanity check against a pure-JAX reference of the same math.
    q_ref = jnp.exp2(8.0 - bits).reshape(N, 1, 1, 1)
    ref = jnp.floor(jnp.floor(x * 255.0) / q_ref) * (q_ref / 255.0)
    bh = b_hard.reshape(N, 1, 1, 1)
    ref = bh * ref + (1.0 - bh) * x
    assert out.shape == (N, C, H, W)
    assert jnp.allclose(out, ref, atol=1e-6)

    print("KERNEL_OK")
</pallas_src>

<mosaic_0001>
module attributes {stable_mosaic.version = 11 : i64} {
  func.func @_posterize_kernel(%arg0: i32, %arg1: i32, %arg2: memref<2x1024xf32, #tpu.memory_space<vmem>>, %arg3: memref<2x3xf32, #tpu.memory_space<vmem>>, %arg4: memref<2x1024xf32, #tpu.memory_space<vmem>>) attributes {dimension_semantics = [#tpu.dimension_semantics<parallel>, #tpu.dimension_semantics<parallel>], iteration_bounds = array<i64: 1, 1>, scalar_prefetch = 0 : i64, scratch_operands = 0 : i64, tpu.core_type = #tpu.core_type<tc>, window_params = [{transform_indices = @transform_0, window_bounds = array<i64: 2, 1024>}, {transform_indices = @transform_1, window_bounds = array<i64: 2, 3>}, {transform_indices = @transform_2, window_bounds = array<i64: 2, 1024>}]} {
    %c0 = arith.constant 0 : index
    %c0_0 = arith.constant 0 : index
    %0 = vector.load %arg2[%c0, %c0_0] : memref<2x1024xf32, #tpu.memory_space<vmem>>, vector<2x1024xf32>
    %c0_1 = arith.constant 0 : index
    %c0_2 = arith.constant 0 : index
    %1 = vector.load %arg3[%c0_1, %c0_2] : memref<2x3xf32, #tpu.memory_space<vmem>>, vector<2x3xf32>
    %2 = vector.extract_strided_slice %1 {offsets = [0, 0], sizes = [2, 1], strides = [1, 1]} : vector<2x3xf32> to vector<2x1xf32>
    %3 = vector.extract_strided_slice %1 {offsets = [0, 1], sizes = [2, 1], strides = [1, 1]} : vector<2x3xf32> to vector<2x1xf32>
    %4 = vector.extract_strided_slice %1 {offsets = [0, 2], sizes = [2, 1], strides = [1, 1]} : vector<2x3xf32> to vector<2x1xf32>
    %cst = arith.constant 2.550000e+02 : f32
    %5 = vector.broadcast %cst : f32 to vector<2x1024xf32>
    %6 = arith.mulf %0, %5 : vector<2x1024xf32>
    %7 = math.floor %6 : vector<2x1024xf32>
    %8 = vector.broadcast %3 : vector<2x1xf32> to vector<2x1024xf32>
    %9 = arith.mulf %7, %8 : vector<2x1024xf32>
    %10 = math.floor %9 : vector<2x1024xf32>
    %11 = vector.broadcast %4 : vector<2x1xf32> to vector<2x1024xf32>
    %12 = arith.mulf %10, %11 : vector<2x1024xf32>
    %13 = vector.broadcast %2 : vector<2x1xf32> to vector<2x1024xf32>
    %14 = arith.mulf %13, %0 : vector<2x1024xf32>
    %15 = arith.addf %14, %12 : vector<2x1024xf32>
    %c0_3 = arith.constant 0 : index
    %c0_4 = arith.constant 0 : index
    %16 = vector.load %arg4[%c0_3, %c0_4] : memref<2x1024xf32, #tpu.memory_space<vmem>>, vector<2x1024xf32>
    tpu.vector_store %arg4[%c0_3, %c0_4], %15 {strides = array<i32>} : memref<2x1024xf32, #tpu.memory_space<vmem>>, vector<2x1024xf32>,
    return
  }
  func.func @transform_0(%arg0: i32, %arg1: i32) -> (i32, i32) {
    %c0_i32 = arith.constant 0 : i32
    return %arg0, %arg1 : i32, i32
  }
  func.func @transform_1(%arg0: i32, %arg1: i32) -> (i32, i32) {
    %c0_i32 = arith.constant 0 : i32
    %c0_i32_0 = arith.constant 0 : i32
    return %arg0, %c0_i32 : i32, i32
  }
  func.func @transform_2(%arg0: i32, %arg1: i32) -> (i32, i32) {
    %c0_i32 = arith.constant 0 : i32
    return %arg0, %arg1 : i32, i32
  }
}

</mosaic_0001>

<llo_original>
// kernel: dposterize_forward.1
$region0: #{dposterize_forward.1}
  #allocation0 [shape = 'u32[]', space=smem, size = 0x4, offset = 0x4, fixed_abs, tag = 'smem constant byte address 0x4 - core index']
  #allocation1 [shape = 'u32[144,128]{1,0:T(1,128)}', space=vmem, size = 0x12000, scoped, tag = 'internal scratch']
  %s0 = inlined_call_operand.vmem [shape: f32[2,1024], index: 0, kind: input, shape index: {}]
  %s1 = inlined_call_operand.vmem [shape: f32[2,3], index: 1, kind: input, shape index: {}]
  %s2 = inlined_call_operand.vmem [shape: f32[2,1024], index: 2, kind: output, shape index: {}]
  %s3 = sld [smem:[#allocation0]]
  $region18: #{dposterize_forward.1} parent=0
    _
  %s5 = ssub.s32 1, %s3
  %s6 = scalar_select 0, %s5, %s3
  // Predicated region
  $region2: #{dposterize_forward.1} parent=0 // pred_check
    _
  $region3: #{dposterize_forward.1} parent=0 // pred_check_branch
    %8 = sbr.rel (0) target = $region5
  $region4: #{dposterize_forward.1} parent=0 // pred_region
    _
  $region5: #{dposterize_forward.1} parent=0 // pred_fallthru
    _
  // Predicated region
  $region6: #{dposterize_forward.1} parent=0 // pred_check
    _
  $region7: #{dposterize_forward.1} parent=0 // pred_check_branch
    %10 = sbr.rel (0) target = $region9
  $region8: #{dposterize_forward.1} parent=0 // pred_region
    _
  $region9: #{dposterize_forward.1} parent=0 // pred_fallthru
    _
  %v11 = vld [vmem:[%s0] sm:$0xff]
  %v12 = vld [vmem:[%s0 + $0x8] sm:$0xff]
  %v13 = vld [vmem:[%s1] sm:$0x3]
  %v14 = vmul.f32 %v11, 255.0
  %v15 = vmul.f32 %v12, 255.0
  %v16 = vfloor.f32 %v14
  %v17 = vfloor.f32 %v15
  %19 = vset.pattern.permute.xlu0 1
  %20 = vperm.xlu0 %19, %v13
  %v21 = vpop.permute.xlu0 %20
  %v23 = vunpack.c.l.s4 269488144
  %v24 = vunpack.c.0.s8 %v23
  %v25 = vlaneseq
  %v26 = vshrl.u32 %v25, 7
  %v27 = vsub.s32 %v24, %v26
  %v28 = vrot.slane %v21, %v27
  %v30 = vmul.f32 %v16, %v28
  %v31 = vmul.f32 %v17, %v28
  %v32 = vfloor.f32 %v30
  %v33 = vfloor.f32 %v31
  %34 = vset.pattern.permute.xlu0 2
  %35 = vperm.xlu0 %34, %v13
  %v36 = vpop.permute.xlu0 %35
  %v38 = vunpack.c.l.s4 269488144
  %v39 = vunpack.c.0.s8 %v38
  %v40 = vlaneseq
  %v41 = vshrl.u32 %v40, 7
  %v42 = vsub.s32 %v39, %v41
  %v43 = vrot.slane %v36, %v42
  %v45 = vmul.f32 %v32, %v43
  %v46 = vmul.f32 %v33, %v43
  %47 = vset.pattern.permute.xlu0 0
  %48 = vperm.xlu0 %47, %v13
  %v49 = vpop.permute.xlu0 %48
  %v53 = vcombine.high %v11, %v11
  %v55 = vunpack.c.l.s4 1983009808
  %v56 = vunpack.c.0.s8 %v55
  %v57 = vlaneseq
  %v58 = vshrl.u32 %v57, 7
  %v59 = vsub.s32 %v56, %v58
  %v60 = vrot.slane %v11, %v59
  %v62 = vunpack.c.l.s4 1983009808
  %v63 = vunpack.c.0.s8 %v62
  %v64 = vlaneseq
  %v65 = vshrl.u32 %v64, 7
  %v66 = vsub.s32 %v63, %v65
  %v67 = vrot.slane %v53, %v66
  %v68 = vcombine.high %v60, %v60
  %v69 = vcombine.high %v67, %v67
  %v70 = vcombine.high %v12, %v12
  %v72 = vunpack.c.l.s4 1983009808
  %v73 = vunpack.c.0.s8 %v72
  %v74 = vlaneseq
  %v75 = vshrl.u32 %v74, 7
  %v76 = vsub.s32 %v73, %v75
  %v77 = vrot.slane %v12, %v76
  %v79 = vunpack.c.l.s4 1983009808
  %v80 = vunpack.c.0.s8 %v79
  %v81 = vlaneseq
  %v82 = vshrl.u32 %v81, 7
  %v83 = vsub.s32 %v80, %v82
  %v84 = vrot.slane %v70, %v83
  %v85 = vcombine.high %v77, %v77
  %v86 = vcombine.high %v84, %v84
  %v95 = vmul.f32 %v49, %v60
  %v96 = vmul.f32 %v49, %v68
  %v97 = vmul.f32 %v49, %v67
  %v98 = vmul.f32 %v49, %v69
  %v99 = vmul.f32 %v49, %v77
  %v100 = vmul.f32 %v49, %v85
  %v101 = vmul.f32 %v49, %v84
  %v102 = vmul.f32 %v49, %v86
  %v105 = vcombine.high %v45, %v45
  %v107 = vunpack.c.l.s4 1983009808
  %v108 = vunpack.c.0.s8 %v107
  %v109 = vlaneseq
  %v110 = vshrl.u32 %v109, 7
  %v111 = vsub.s32 %v108, %v110
  %v112 = vrot.slane %v45, %v111
  %v114 = vunpack.c.l.s4 1983009808
  %v115 = vunpack.c.0.s8 %v114
  %v116 = vlaneseq
  %v117 = vshrl.u32 %v116, 7
  %v118 = vsub.s32 %v115, %v117
  %v119 = vrot.slane %v105, %v118
  %v120 = vcombine.high %v112, %v112
  %v121 = vcombine.high %v119, %v119
  %v122 = vcombine.high %v46, %v46
  %v124 = vunpack.c.l.s4 1983009808
  %v125 = vunpack.c.0.s8 %v124
  %v126 = vlaneseq
  %v127 = vshrl.u32 %v126, 7
  %v128 = vsub.s32 %v125, %v127
  %v129 = vrot.slane %v46, %v128
  %v131 = vunpack.c.l.s4 1983009808
  %v132 = vunpack.c.0.s8 %v131
  %v133 = vlaneseq
  %v134 = vshrl.u32 %v133, 7
  %v135 = vsub.s32 %v132, %v134
  %v136 = vrot.slane %v122, %v135
  %v137 = vcombine.high %v129, %v129
  %v138 = vcombine.high %v136, %v136
  %v147 = vadd.f32 %v95, %v112
  %v148 = vadd.f32 %v96, %v120
  %v149 = vadd.f32 %v97, %v119
  %v150 = vadd.f32 %v98, %v121
  %v151 = vadd.f32 %v99, %v129
  %v152 = vadd.f32 %v100, %v137
  %v153 = vadd.f32 %v101, %v136
  %v154 = vadd.f32 %v102, %v138
  %v163 = vcombine.low %v147, %v148
  %v164 = vcombine.low %v149, %v150
  %v166 = vunpack.c.l.s4 1983009808
  %v167 = vunpack.c.0.s8 %v166
  %v168 = vlaneseq
  %v169 = vshrl.u32 %v168, 7
  %v170 = vsub.s32 %v167, %v169
  %v171 = vrot.slane %v163, %v170
  %v173 = vunpack.c.l.s4 1983009808
  %v174 = vunpack.c.0.s8 %v173
  %v175 = vlaneseq
  %v176 = vshrl.u32 %v175, 7
  %v177 = vsub.s32 %v174, %v176
  %v178 = vrot.slane %v164, %v177
  %v179 = vcombine.low %v171, %v178
  %v180 = vcombine.low %v151, %v152
  %v181 = vcombine.low %v153, %v154
  %v183 = vunpack.c.l.s4 1983009808
  %v184 = vunpack.c.0.s8 %v183
  %v185 = vlaneseq
  %v186 = vshrl.u32 %v185, 7
  %v187 = vsub.s32 %v184, %v186
  %v188 = vrot.slane %v180, %v187
  %v190 = vunpack.c.l.s4 1983009808
  %v191 = vunpack.c.0.s8 %v190
  %v192 = vlaneseq
  %v193 = vshrl.u32 %v192, 7
  %v194 = vsub.s32 %v191, %v193
  %v195 = vrot.slane %v181, %v194
  %v196 = vcombine.low %v188, %v195
  %199 = vst [vmem:[%s2] sm:$0xff] %v179
  %200 = vst [vmem:[%s2 + $0x8] sm:$0xff] %v196
  // Predicated region
  $region10: #{dposterize_forward.1} parent=0 // pred_check
    _
  $region11: #{dposterize_forward.1} parent=0 // pred_check_branch
    %202 = sbr.rel (0) target = $region13
  $region12: #{dposterize_forward.1} parent=0 // pred_region
    _
  $region13: #{dposterize_forward.1} parent=0 // pred_fallthru
    _
  // Predicated region
  $region14: #{dposterize_forward.1} parent=0 // pred_check
    _
  $region15: #{dposterize_forward.1} parent=0 // pred_check_branch
    %204 = sbr.rel (0) target = $region17
  $region16: #{dposterize_forward.1} parent=0 // pred_region
    _
  $region17: #{dposterize_forward.1} parent=0 // pred_fallthru
    _

</llo_original>
